<compile_context>
chip_gen: v7x
topology: tpu7x:2x2x1
jax: 0.10.0
libtpu: 0.0.40
codegen_flags: <defaults>
</compile_context>

<pallas_src>
import functools

import jax
import jax.numpy as jnp
from jax import lax
from jax.experimental import pallas as pl
from jax.experimental.pallas import tpu as pltpu


def _repcpe_kernel(w_ref, b_ref, x_ref, o_ref, *, H, W, HWp, spatial_axis):
    """Fused depthwise-3x3 conv (BN folded) + bias + residual add.

    The zero-padded flattened image plane (length HWp) lives on axis
    `spatial_axis` of the 2-D activation block; the other axis carries the
    (batch, channel) rows / channel lanes that the per-channel taps broadcast
    over.

    w_ref: (9, r, 1) or (9, 1, c)   folded conv*BN taps, tap index k = 3*di+dj
    b_ref: (1, r, 1) or (1, 1, c)   folded BN bias
    x_ref / o_ref: (rows, lanes)    activation block (also the residual source)
    """
    x = x_ref[...].astype(jnp.float32)
    size = x.shape[spatial_axis]

    # Flattened spatial index q = h*W + w as a vector along the spatial axis
    # (broadcasts over the channel axis).
    if spatial_axis == 1:                      # spatial on lanes
        q = lax.broadcasted_iota(jnp.int32, (1, size), 1)
    else:                                      # spatial on sublanes (whole images per block)
        q = lax.broadcasted_iota(jnp.int32, (size, 1), 0) % HWp
    col = q % W
    not_left = col != 0
    not_right = col != (W - 1)
    not_top = q >= W
    not_bot = q < (H - 1) * W

    def sroll(v, shift):
        return pltpu.roll(v, shift=shift % size, axis=spatial_axis)

    # Column-shifted (W direction) neighbours, zero outside the image.
    x_l = jnp.where(not_left, sroll(x, 1), 0.0)    # x[h, w-1]
    x_r = jnp.where(not_right, sroll(x, -1), 0.0)  # x[h, w+1]

    w = [w_ref[k].astype(jnp.float32) for k in range(9)]
    b = b_ref[0].astype(jnp.float32)

    # Residual + folded bias + middle-row taps (di = 1).
    acc = x + b + (w[3] * x_l + w[4] * x + w[5] * x_r)
    # Top-row taps (di = 0): out[h] += row-sum evaluated at input row h-1.
    rs0 = w[0] * x_l + w[1] * x + w[2] * x_r
    acc = acc + jnp.where(not_top, sroll(rs0, W), 0.0)
    # Bottom-row taps (di = 2): out[h] += row-sum evaluated at input row h+1.
    rs2 = w[6] * x_l + w[7] * x + w[8] * x_r
    acc = acc + jnp.where(not_bot, sroll(rs2, -W), 0.0)

    o_ref[...] = acc.astype(o_ref.dtype)


def _round_up(x, m):
    return (x + m - 1) // m * m


def _vmem_capacity_bytes():
    try:
        return int(pltpu.get_tpu_info().vmem_capacity_bytes)
    except Exception:
        return 64 << 20            # conservative fallback: v7x per-TensorCore VMEM


def _pick_row_block(total_rows, per_row_bytes, target_bytes):
    """Largest row block that divides total_rows, keeps the (8,128) tiling legal
    (multiple of 8, or the full extent) and fits target_bytes.  Prefers >=2 grid
    steps when splitting does not shrink blocks below ~512 KiB (v7x: 2 TCs)."""
    cands = [d for d in range(8, total_rows + 1, 8) if total_rows % d == 0]
    if total_rows not in cands:
        cands.append(total_rows)
    fitting = [d for d in cands if d * per_row_bytes <= target_bytes]
    rb = max(fitting) if fitting else min(cands)
    if rb == total_rows:
        smaller = [d for d in cands if d <= total_rows // 2]
        if smaller and max(smaller) * per_row_bytes >= (512 << 10):
            rb = max(smaller)
    return rb


def _pick_batch_block(n, per_image_bytes, target_bytes):
    divs = [d for d in range(1, n + 1) if n % d == 0]
    fitting = [d for d in divs if d * per_image_bytes <= target_bytes]
    nb = max(fitting) if fitting else 1
    if nb == n and n > 1:
        smaller = [d for d in divs if d <= n // 2]
        if smaller and max(smaller) * per_image_bytes >= (512 << 10):
            nb = max(smaller)
    return nb


def _pick_channel_block(cp, rows_per_image, target_bytes):
    nlanes = cp // 128
    best = 128
    for k in range(1, nlanes + 1):
        if nlanes % k == 0 and rows_per_image * (128 * k) * 4 <= target_bytes:
            best = 128 * k
    return best


def repcpe_bn(x, dw_weight, bn_gamma, bn_beta, bn_mean, bn_var, eps=1e-5):
    """RepCPEBN forward (eval): out = x + BN(DWConv3x3(x)).  NCHW in / NCHW out.

    x: (N, C, H, W); dw_weight: (C, 3, 3); BN params: (C,).
    """
    N, C, H, W = x.shape
    io_dtype = x.dtype
    HW = H * W

    # ---- fold BatchNorm (linear in eval) into the depthwise conv ----
    scale = bn_gamma / jnp.sqrt(bn_var + eps)                          # (C,)
    eff_w = (dw_weight * scale[:, None, None]).astype(jnp.float32)     # (C, 3, 3)
    eff_b = (bn_beta - bn_mean * scale).astype(jnp.float32)            # (C,)
    taps = eff_w.reshape(C, 9).T                                       # (9, C), k = 3*di + dj

    # ---- layout selection: pad whichever of {C, H*W} wastes less ----
    cp = _round_up(C, 128)
    hwp_lane = _round_up(HW, 128)   # spatial-on-lanes padding
    hwp_sub = _round_up(HW, 8)      # channels-on-lanes padding
    spatial_on_lanes = (C * hwp_lane) <= (cp * hwp_sub)

    vmem_cap = _vmem_capacity_bytes()
    block_target = min(4 << 20, vmem_cap // 24)    # f32 working-block target

    if spatial_on_lanes:
        # rows = (n, c) pairs on sublanes, flattened (padded) image on lanes.
        # No transpose needed: NCHW -> (N*C, H*W) is a pure reshape.
        hwp = hwp_lane
        rows = N * C
        x_arr = x.reshape(rows, HW)
        if hwp != HW:
            x_arr = jnp.pad(x_arr, ((0, 0), (0, hwp - HW)))
        # Per-row taps / bias (channel pattern repeated for every batch image).
        w_arr = jnp.tile(taps, (1, N))[:, :, None]                 # (9, N*C, 1)
        b_arr = jnp.tile(eff_b[None, :], (1, N))[:, :, None]       # (1, N*C, 1)

        per_row_f32 = hwp * 4
        rb = _pick_row_block(rows, per_row_f32, block_target)
        grid = (rows // rb,)
        in_specs = [
            pl.BlockSpec((9, rb, 1), lambda r: (0, r, 0)),
            pl.BlockSpec((1, rb, 1), lambda r: (0, r, 0)),
            pl.BlockSpec((rb, hwp), lambda r: (r, 0)),
        ]
        out_specs = pl.BlockSpec((rb, hwp), lambda r: (r, 0))
        out_shape = jax.ShapeDtypeStruct((rows, hwp), io_dtype)
        dims = ("parallel",)
        kernel = functools.partial(_repcpe_kernel, H=H, W=W, HWp=hwp, spatial_axis=1)
        block_f32 = rb * per_row_f32
    else:
        # rows = (n, h, w) on sublanes (whole images per block), channels on lanes.
        # TODO(synk): in an NHWC-native model this transpose disappears; spatial
        # tiling with a 1-row halo would be needed only for very large planes.
        hwp = hwp_sub
        x_arr = jnp.transpose(x.reshape(N, C, HW), (0, 2, 1))            # (N, HW, C)
        x_arr = jnp.pad(x_arr, ((0, 0), (0, hwp - HW), (0, cp - C)))
        x_arr = x_arr.reshape(N * hwp, cp)
        w_arr = jnp.pad(taps, ((0, 0), (0, cp - C)))[:, None, :]         # (9, 1, Cp)
        b_arr = jnp.pad(eff_b[None, :], ((0, 0), (0, cp - C)))[:, None, :]  # (1, 1, Cp)

        cb = _pick_channel_block(cp, hwp, block_target)
        nb = _pick_batch_block(N, hwp * cb * 4, block_target)
        rb = nb * hwp
        grid = (N // nb, cp // cb)
        in_specs = [
            pl.BlockSpec((9, 1, cb), lambda n, c: (0, 0, c)),
            pl.BlockSpec((1, 1, cb), lambda n, c: (0, 0, c)),
            pl.BlockSpec((rb, cb), lambda n, c: (n, c)),
        ]
        out_specs = pl.BlockSpec((rb, cb), lambda n, c: (n, c))
        out_shape = jax.ShapeDtypeStruct((N * hwp, cp), io_dtype)
        dims = ("parallel", "parallel")
        kernel = functools.partial(_repcpe_kernel, H=H, W=W, HWp=hwp, spatial_axis=0)
        block_f32 = rb * cb * 4

    # VMEM budget: double-buffered input + output blocks (I/O dtype) plus
    # ~6-8 block-sized f32 intermediates, capped with headroom below the
    # physical capacity (64 MiB on v7x, 128 MiB on v5e/v6e).
    io_bytes = block_f32 // 4 * jnp.dtype(io_dtype).itemsize
    vmem_need = 4 * io_bytes + 8 * block_f32 + (2 << 20)
    vmem_limit = int(min(int(0.85 * vmem_cap), max(16 << 20, vmem_need)))

    out = pl.pallas_call(
        kernel,
        grid=grid,
        in_specs=in_specs,
        out_specs=out_specs,
        out_shape=out_shape,
        compiler_params=pltpu.CompilerParams(
            dimension_semantics=dims, vmem_limit_bytes=vmem_limit),
    )(w_arr, b_arr, x_arr)

    if spatial_on_lanes:
        return out[:, :HW].reshape(N, C, H, W)
    out = out.reshape(N, hwp, cp)[:, :HW, :C]
    return jnp.transpose(out, (0, 2, 1)).reshape(N, C, H, W)


def _reference(x, dw_weight, bn_gamma, bn_beta, bn_mean, bn_var, eps=1e-5):
    """Pure-JAX reference: x + BN(depthwise_conv3x3(x))."""
    C = x.shape[1]
    w = dw_weight[:, None, :, :]  # (C, 1, 3, 3) OIHW with feature_group_count=C
    conv = jax.lax.conv_general_dilated(
        x, w, window_strides=(1, 1), padding=((1, 1), (1, 1)),
        dimension_numbers=("NCHW", "OIHW", "NCHW"),
        feature_group_count=C)
    scale = (bn_gamma / jnp.sqrt(bn_var + eps))[None, :, None, None]
    bn = scale * (conv - bn_mean[None, :, None, None]) + bn_beta[None, :, None, None]
    return x + bn


if __name__ == "__main__":
    key = jax.random.PRNGKey(0)
    k_x, k_w, k_g, k_b, k_m, k_v = jax.random.split(key, 6)

    N, C, H, W = 2, 4, 16, 16
    x = jax.random.normal(k_x, (N, C, H, W), dtype=jnp.float32)

    # Deterministic synthetic parameters (shapes follow the module __init__):
    # depthwise conv weight (dim, 1, 3, 3) stored squeezed as (C, 3, 3),
    # BatchNorm2d(dim): gamma, beta, running_mean, running_var.
    dw_weight = 0.1 * jax.random.normal(k_w, (C, 3, 3), dtype=jnp.float32)
    bn_gamma = 1.0 + 0.1 * jax.random.normal(k_g, (C,), dtype=jnp.float32)
    bn_beta = 0.1 * jax.random.normal(k_b, (C,), dtype=jnp.float32)
    bn_mean = 0.1 * jax.random.normal(k_m, (C,), dtype=jnp.float32)
    bn_var = jnp.abs(jax.random.normal(k_v, (C,), dtype=jnp.float32)) + 0.5

    out = repcpe_bn(x, dw_weight, bn_gamma, bn_beta, bn_mean, bn_var)
    out = jax.block_until_ready(out)

    ref = _reference(x, dw_weight, bn_gamma, bn_beta, bn_mean, bn_var)
    assert out.shape == ref.shape and out.dtype == ref.dtype
    assert jnp.allclose(out, ref, atol=1e-4, rtol=1e-4), "mismatch vs reference"

    # TODO(synk): tuple-input passthrough `(out, x[1])` is trivial wrapper logic
    # handled outside the kernel (inputs here are plain arrays).
    print("KERNEL_OK")
</pallas_src>

<mosaic_0001>
module attributes {stable_mosaic.version = 11 : i64} {
  func.func @_repcpe_kernel(%arg0: i32, %arg1: memref<9x8x1xf32, #tpu.memory_space<vmem>>, %arg2: memref<1x8x1xf32, #tpu.memory_space<vmem>>, %arg3: memref<8x256xf32, #tpu.memory_space<vmem>>, %arg4: memref<8x256xf32, #tpu.memory_space<vmem>>) attributes {dimension_semantics = [#tpu.dimension_semantics<parallel>], iteration_bounds = array<i64: 1>, scalar_prefetch = 0 : i64, scratch_operands = 0 : i64, tpu.core_type = #tpu.core_type<tc>, window_params = [{transform_indices = @transform_0, window_bounds = array<i64: 9, 8, 1>}, {transform_indices = @transform_1, window_bounds = array<i64: 1, 8, 1>}, {transform_indices = @transform_2, window_bounds = array<i64: 8, 256>}, {transform_indices = @transform_3, window_bounds = array<i64: 8, 256>}]} {
    %c0 = arith.constant 0 : index
    %c0_0 = arith.constant 0 : index
    %0 = vector.load %arg3[%c0, %c0_0] : memref<8x256xf32, #tpu.memory_space<vmem>>, vector<8x256xf32>
    %1 = tpu.iota {dimensions = array<i32: 1>} : vector<1x256xi32>
    %c16_i32 = arith.constant 16 : i32
    %c0_i32 = arith.constant 0 : i32
    %2 = arith.cmpi eq, %c16_i32, %c0_i32 : i32
    %c1_i32 = arith.constant 1 : i32
    %3 = arith.select %2, %c1_i32, %c16_i32 : i32
    %4 = vector.broadcast %3 : i32 to vector<1x256xi32>
    %5 = arith.remsi %1, %4 : vector<1x256xi32>
    %c0_i32_1 = arith.constant 0 : i32
    %6 = vector.broadcast %c0_i32_1 : i32 to vector<1x256xi32>
    %7 = arith.cmpi ne, %5, %6 : vector<1x256xi32>
    %c0_i32_2 = arith.constant 0 : i32
    %8 = vector.broadcast %c0_i32_2 : i32 to vector<1x256xi32>
    %9 = arith.cmpi slt, %5, %8 : vector<1x256xi32>
    %c0_i32_3 = arith.constant 0 : i32
    %10 = arith.cmpi slt, %3, %c0_i32_3 : i32
    %11 = vector.broadcast %10 : i1 to vector<1x256xi1>
    %12 = vector.broadcast %11 : vector<1x256xi1> to vector<1x256xi1>
    %13 = arith.xori %9, %12 : vector<1x256xi1>
    %14 = arith.andi %13, %7 : vector<1x256xi1>
    %15 = vector.broadcast %3 : i32 to vector<1x256xi32>
    %16 = arith.addi %5, %15 : vector<1x256xi32>
    %17 = arith.select %14, %16, %5 : vector<1x256xi1>, vector<1x256xi32>
    %c0_i32_4 = arith.constant 0 : i32
    %18 = vector.broadcast %c0_i32_4 : i32 to vector<1x256xi32>
    %19 = arith.cmpi ne, %17, %18 : vector<1x256xi32>
    %c15_i32 = arith.constant 15 : i32
    %20 = vector.broadcast %c15_i32 : i32 to vector<1x256xi32>
    %21 = arith.cmpi ne, %17, %20 : vector<1x256xi32>
    %c16_i32_5 = arith.constant 16 : i32
    %22 = vector.broadcast %c16_i32_5 : i32 to vector<1x256xi32>
    %23 = arith.cmpi sge, %1, %22 : vector<1x256xi32>
    %c240_i32 = arith.constant 240 : i32
    %24 = vector.broadcast %c240_i32 : i32 to vector<1x256xi32>
    %25 = arith.cmpi slt, %1, %24 : vector<1x256xi32>
    %c1_i32_6 = arith.constant 1 : i32
    %26 = tpu.dynamic_rotate %0 by %c1_i32_6 dim 1 : vector<8x256xf32>, i32 -> vector<8x256xf32>
    %cst = arith.constant 0.000000e+00 : f32
    %27 = vector.shape_cast %19 : vector<1x256xi1> to vector<1x256xi1>
    %28 = vector.broadcast %27 : vector<1x256xi1> to vector<8x256xi1>
    %29 = vector.broadcast %cst : f32 to vector<8x256xf32>
    %30 = arith.select %28, %26, %29 : vector<8x256xi1>, vector<8x256xf32>
    %c255_i32 = arith.constant 255 : i32
    %31 = tpu.dynamic_rotate %0 by %c255_i32 dim 1 : vector<8x256xf32>, i32 -> vector<8x256xf32>
    %cst_7 = arith.constant 0.000000e+00 : f32
    %32 = vector.shape_cast %21 : vector<1x256xi1> to vector<1x256xi1>
    %33 = vector.broadcast %32 : vector<1x256xi1> to vector<8x256xi1>
    %34 = vector.broadcast %cst_7 : f32 to vector<8x256xf32>
    %35 = arith.select %33, %31, %34 : vector<8x256xi1>, vector<8x256xf32>
    %c0_8 = arith.constant 0 : index
    %c0_9 = arith.constant 0 : index
    %c0_10 = arith.constant 0 : index
    %36 = vector.load %arg1[%c0_8, %c0_9, %c0_10] : memref<9x8x1xf32, #tpu.memory_space<vmem>>, vector<1x8x1xf32>
    %37 = vector.shape_cast %36 : vector<1x8x1xf32> to vector<8x1xf32>
    %c1 = arith.constant 1 : index
    %c0_11 = arith.constant 0 : index
    %c0_12 = arith.constant 0 : index
    %38 = vector.load %arg1[%c1, %c0_11, %c0_12] : memref<9x8x1xf32, #tpu.memory_space<vmem>>, vector<1x8x1xf32>
    %39 = vector.shape_cast %38 : vector<1x8x1xf32> to vector<8x1xf32>
    %c2 = arith.constant 2 : index
    %c0_13 = arith.constant 0 : index
    %c0_14 = arith.constant 0 : index
    %40 = vector.load %arg1[%c2, %c0_13, %c0_14] : memref<9x8x1xf32, #tpu.memory_space<vmem>>, vector<1x8x1xf32>
    %41 = vector.shape_cast %40 : vector<1x8x1xf32> to vector<8x1xf32>
    %c3 = arith.constant 3 : index
    %c0_15 = arith.constant 0 : index
    %c0_16 = arith.constant 0 : index
    %42 = vector.load %arg1[%c3, %c0_15, %c0_16] : memref<9x8x1xf32, #tpu.memory_space<vmem>>, vector<1x8x1xf32>
    %43 = vector.shape_cast %42 : vector<1x8x1xf32> to vector<8x1xf32>
    %c4 = arith.constant 4 : index
    %c0_17 = arith.constant 0 : index
    %c0_18 = arith.constant 0 : index
    %44 = vector.load %arg1[%c4, %c0_17, %c0_18] : memref<9x8x1xf32, #tpu.memory_space<vmem>>, vector<1x8x1xf32>
    %45 = vector.shape_cast %44 : vector<1x8x1xf32> to vector<8x1xf32>
    %c5 = arith.constant 5 : index
    %c0_19 = arith.constant 0 : index
    %c0_20 = arith.constant 0 : index
    %46 = vector.load %arg1[%c5, %c0_19, %c0_20] : memref<9x8x1xf32, #tpu.memory_space<vmem>>, vector<1x8x1xf32>
    %47 = vector.shape_cast %46 : vector<1x8x1xf32> to vector<8x1xf32>
    %c6 = arith.constant 6 : index
    %c0_21 = arith.constant 0 : index
    %c0_22 = arith.constant 0 : index
    %48 = vector.load %arg1[%c6, %c0_21, %c0_22] : memref<9x8x1xf32, #tpu.memory_space<vmem>>, vector<1x8x1xf32>
    %49 = vector.shape_cast %48 : vector<1x8x1xf32> to vector<8x1xf32>
    %c7 = arith.constant 7 : index
    %c0_23 = arith.constant 0 : index
    %c0_24 = arith.constant 0 : index
    %50 = vector.load %arg1[%c7, %c0_23, %c0_24] : memref<9x8x1xf32, #tpu.memory_space<vmem>>, vector<1x8x1xf32>
    %51 = vector.shape_cast %50 : vector<1x8x1xf32> to vector<8x1xf32>
    %c8 = arith.constant 8 : index
    %c0_25 = arith.constant 0 : index
    %c0_26 = arith.constant 0 : index
    %52 = vector.load %arg1[%c8, %c0_25, %c0_26] : memref<9x8x1xf32, #tpu.memory_space<vmem>>, vector<1x8x1xf32>
    %53 = vector.shape_cast %52 : vector<1x8x1xf32> to vector<8x1xf32>
    %c0_27 = arith.constant 0 : index
    %c0_28 = arith.constant 0 : index
    %c0_29 = arith.constant 0 : index
    %54 = vector.load %arg2[%c0_27, %c0_28, %c0_29] : memref<1x8x1xf32, #tpu.memory_space<vmem>>, vector<1x8x1xf32>
    %55 = vector.shape_cast %54 : vector<1x8x1xf32> to vector<8x1xf32>
    %56 = vector.broadcast %55 : vector<8x1xf32> to vector<8x256xf32>
    %57 = arith.addf %0, %56 : vector<8x256xf32>
    %58 = vector.broadcast %43 : vector<8x1xf32> to vector<8x256xf32>
    %59 = arith.mulf %58, %30 : vector<8x256xf32>
    %60 = vector.broadcast %45 : vector<8x1xf32> to vector<8x256xf32>
    %61 = arith.mulf %60, %0 : vector<8x256xf32>
    %62 = arith.addf %59, %61 : vector<8x256xf32>
    %63 = vector.broadcast %47 : vector<8x1xf32> to vector<8x256xf32>
    %64 = arith.mulf %63, %35 : vector<8x256xf32>
    %65 = arith.addf %62, %64 : vector<8x256xf32>
    %66 = arith.addf %57, %65 : vector<8x256xf32>
    %67 = vector.broadcast %37 : vector<8x1xf32> to vector<8x256xf32>
    %68 = arith.mulf %67, %30 : vector<8x256xf32>
    %69 = vector.broadcast %39 : vector<8x1xf32> to vector<8x256xf32>
    %70 = arith.mulf %69, %0 : vector<8x256xf32>
    %71 = arith.addf %68, %70 : vector<8x256xf32>
    %72 = vector.broadcast %41 : vector<8x1xf32> to vector<8x256xf32>
    %73 = arith.mulf %72, %35 : vector<8x256xf32>
    %74 = arith.addf %71, %73 : vector<8x256xf32>
    %c16_i32_30 = arith.constant 16 : i32
    %75 = tpu.dynamic_rotate %74 by %c16_i32_30 dim 1 : vector<8x256xf32>, i32 -> vector<8x256xf32>
    %cst_31 = arith.constant 0.000000e+00 : f32
    %76 = vector.shape_cast %23 : vector<1x256xi1> to vector<1x256xi1>
    %77 = vector.broadcast %76 : vector<1x256xi1> to vector<8x256xi1>
    %78 = vector.broadcast %cst_31 : f32 to vector<8x256xf32>
    %79 = arith.select %77, %75, %78 : vector<8x256xi1>, vector<8x256xf32>
    %80 = arith.addf %66, %79 : vector<8x256xf32>
    %81 = vector.broadcast %49 : vector<8x1xf32> to vector<8x256xf32>
    %82 = arith.mulf %81, %30 : vector<8x256xf32>
    %83 = vector.broadcast %51 : vector<8x1xf32> to vector<8x256xf32>
    %84 = arith.mulf %83, %0 : vector<8x256xf32>
    %85 = arith.addf %82, %84 : vector<8x256xf32>
    %86 = vector.broadcast %53 : vector<8x1xf32> to vector<8x256xf32>
    %87 = arith.mulf %86, %35 : vector<8x256xf32>
    %88 = arith.addf %85, %87 : vector<8x256xf32>
    %c240_i32_32 = arith.constant 240 : i32
    %89 = tpu.dynamic_rotate %88 by %c240_i32_32 dim 1 : vector<8x256xf32>, i32 -> vector<8x256xf32>
    %cst_33 = arith.constant 0.000000e+00 : f32
    %90 = vector.shape_cast %25 : vector<1x256xi1> to vector<1x256xi1>
    %91 = vector.broadcast %90 : vector<1x256xi1> to vector<8x256xi1>
    %92 = vector.broadcast %cst_33 : f32 to vector<8x256xf32>
    %93 = arith.select %91, %89, %92 : vector<8x256xi1>, vector<8x256xf32>
    %94 = arith.addf %80, %93 : vector<8x256xf32>
    %c0_34 = arith.constant 0 : index
    %c0_35 = arith.constant 0 : index
    %95 = vector.load %arg4[%c0_34, %c0_35] : memref<8x256xf32, #tpu.memory_space<vmem>>, vector<8x256xf32>
    tpu.vector_store %arg4[%c0_34, %c0_35], %94 {strides = array<i32>} : memref<8x256xf32, #tpu.memory_space<vmem>>, vector<8x256xf32>,
    return
  }
  func.func @transform_0(%arg0: i32) -> (i32, i32, i32) {
    %c0_i32 = arith.constant 0 : i32
    %c0_i32_0 = arith.constant 0 : i32
    %c0_i32_1 = arith.constant 0 : i32
    return %c0_i32, %arg0, %c0_i32_0 : i32, i32, i32
  }
  func.func @transform_1(%arg0: i32) -> (i32, i32, i32) {
    %c0_i32 = arith.constant 0 : i32
    %c0_i32_0 = arith.constant 0 : i32
    %c0_i32_1 = arith.constant 0 : i32
    return %c0_i32, %arg0, %c0_i32_0 : i32, i32, i32
  }
  func.func @transform_2(%arg0: i32) -> (i32, i32) {
    %c0_i32 = arith.constant 0 : i32
    %c0_i32_0 = arith.constant 0 : i32
    return %arg0, %c0_i32 : i32, i32
  }
  func.func @transform_3(%arg0: i32) -> (i32, i32) {
    %c0_i32 = arith.constant 0 : i32
    %c0_i32_0 = arith.constant 0 : i32
    return %arg0, %c0_i32 : i32, i32
  }
}

</mosaic_0001>

<llo_original>
// kernel: tpu_custom_call.1
$region0: #{tpu_custom_call.1}
  #allocation0 [shape = 'u32[]', space=smem, size = 0x4, offset = 0x4, fixed_abs, tag = 'smem constant byte address 0x4 - core index']
  #allocation1 [shape = 'u32[144,128]{1,0:T(1,128)}', space=vmem, size = 0x12000, scoped, tag = 'internal scratch']
  %s0 = inlined_call_operand.vmem [shape: f32[9,8,1], index: 0, kind: input, shape index: {}]
  %s1 = inlined_call_operand.vmem [shape: f32[1,8,1], index: 1, kind: input, shape index: {}]
  %s2 = inlined_call_operand.vmem [shape: f32[8,256], index: 2, kind: input, shape index: {}]
  %s3 = inlined_call_operand.hbm [shape: f32[8,256], index: 3, kind: output, shape index: {}]
  %s4 = sld [smem:[#allocation0]]
  $region22: #{tpu_custom_call.1} parent=0
    _
  %s6 = ssub.s32 1, %s4
  %s7 = scalar_select 0, %s6, %s4
  $region1: #{tpu_custom_call.1} parent=0
    #allocation2 [shape = 'u8[8192]{0}', space=vmem, size = 0x2000, scoped, tag = 'output window, operand 0, single buffered']
    #allocation3 [shape = 's32[1]{0}', space=sflag, size = 0x4, scoped, tag = 'scoped memory for tpu_custom_call.1']
    %8 = vsyncpa [#allocation3], 0
    // Predicated region
    $region2: #{tpu_custom_call.1} parent=1 // pred_check
      _
    $region3: #{tpu_custom_call.1} parent=1 // pred_check_branch
      %10 = sbr.rel (0) target = $region5
    $region4: #{tpu_custom_call.1} parent=1 // pred_region
      _
    $region5: #{tpu_custom_call.1} parent=1 // pred_fallthru
      _
    // Predicated region
    $region6: #{tpu_custom_call.1} parent=1 // pred_check
      _
    $region7: #{tpu_custom_call.1} parent=1 // pred_check_branch
      %12 = sbr.rel (0) target = $region9
    $region8: #{tpu_custom_call.1} parent=1 // pred_region
      _
    $region9: #{tpu_custom_call.1} parent=1 // pred_fallthru
      _
    // Predicated region
    $region10: #{tpu_custom_call.1} parent=1 // pred_check
      _
    $region11: #{tpu_custom_call.1} parent=1 // pred_check_branch
      %14 = sbr.rel (0) target = $region13
    $region12: #{tpu_custom_call.1} parent=1 // pred_region
      _
    $region13: #{tpu_custom_call.1} parent=1 // pred_fallthru
      _
    %v15 = vld [vmem:[%s2] sm:$0xff]
    %v16 = vld [vmem:[%s2 + $0x8] sm:$0xff]
    %v17 = vlaneseq
    %v18 = vand.u32 %v17, 127
    %v19 = vadd.s32 %v18, 128
    %vm20 = vcmp.lt.s32.totalorder %v18, 0
    %v21 = vsub.s32 0, %v18
    %v22 = vsel %vm20, %v21, %v18
    %v23 = vshrl.u32 %v22, 4
    %v24 = vand.u32 %v22, 15
    %v25 = vsub.s32 0, %v24
    %v26 = vsel %vm20, %v25, %v24
    %vm27 = vcmp.lt.s32.totalorder %v19, 0
    %v28 = vsub.s32 0, %v19
    %v29 = vsel %vm27, %v28, %v19
    %v30 = vshrl.u32 %v29, 4
    %v31 = vand.u32 %v29, 15
    %v32 = vsub.s32 0, %v31
    %v33 = vsel %vm27, %v32, %v31
    %vm34 = vcmp.ne.s32.totalorder %v26, 0
    %vm35 = vcmp.ne.s32.totalorder %v33, 0
    %vm36 = vcmp.lt.s32.totalorder %v26, 0
    %vm37 = vcmp.lt.s32.totalorder %v33, 0
    %vm38 = vmand %vm36, %vm34
    %vm39 = vmand %vm37, %vm35
    %v40 = vadd.s32 %v26, 16
    %v41 = vadd.s32 %v33, 16
    %v42 = vsel %vm38, %v40, %v26
    %v43 = vsel %vm39, %v41, %v33
    %vm44 = vcmp.ne.s32.totalorder %v42, 0
    %vm45 = vcmp.ne.s32.totalorder %v43, 0
    %vm46 = vcmp.ne.s32.totalorder %v42, 15
    %vm47 = vcmp.ne.s32.totalorder %v43, 15
    %vm48 = vcmp.ge.s32.totalorder %v18, 16
    %vm49 = vcmp.ge.s32.totalorder %v19, 16
    %vm50 = vcmp.lt.s32.totalorder %v18, 240
    %vm51 = vcmp.lt.s32.totalorder %v19, 240
    %52 = vrot.lane.b32.xlu0 %v15, 1
    %v53 = vpop.permute.xlu0 %52
    %54 = vrot.lane.b32.xlu0 %v16, 1
    %v55 = vpop.permute.xlu0 %54
    %vm56 = vcmp.lt.s32.totalorder %v18, 1
    %v57 = vsel %vm56, %v53, %v55
    %v58 = vsel %vm56, %v55, %v53
    %v59 = vsel %vm44, 1, 0
    %v60 = vsel %vm45, 1, 0
    %vm61 = vcmp.eq.s32.totalorder %v59, 1
    %vm62 = vcmp.eq.s32.totalorder %v60, 1
    %v63 = vsel %vm61, %v58, 0.0
    %v64 = vsel %vm62, %v57, 0.0
    %65 = vrot.lane.b32.xlu0 %v15, 127
    %v66 = vpop.permute.xlu0 %65
    %67 = vrot.lane.b32.xlu0 %v16, 127
    %v68 = vpop.permute.xlu0 %67
    %vm69 = vcmp.lt.s32.totalorder %v18, 127
    %v70 = vsel %vm69, %v66, %v68
    %v71 = vsel %vm69, %v68, %v66
    %v72 = vsel %vm46, 1, 0
    %v73 = vsel %vm47, 1, 0
    %vm74 = vcmp.eq.s32.totalorder %v72, 1
    %vm75 = vcmp.eq.s32.totalorder %v73, 1
    %v76 = vsel %vm74, %v70, 0.0
    %v77 = vsel %vm75, %v71, 0.0
    %v78 = vld [vmem:[%s0] sm:$0xff]
    %s79 = scalar_lea.vmem %s0, 8
    %v80 = vld [vmem:[%s79] sm:$0xff]
    %s81 = scalar_lea.vmem %s0, 16
    %v82 = vld [vmem:[%s81] sm:$0xff]
    %s83 = scalar_lea.vmem %s0, 24
    %v84 = vld [vmem:[%s83] sm:$0xff]
    %s85 = scalar_lea.vmem %s0, 32
    %v86 = vld [vmem:[%s85] sm:$0xff]
    %s87 = scalar_lea.vmem %s0, 40
    %v88 = vld [vmem:[%s87] sm:$0xff]
    %s89 = scalar_lea.vmem %s0, 48
    %v90 = vld [vmem:[%s89] sm:$0xff]
    %s91 = scalar_lea.vmem %s0, 56
    %v92 = vld [vmem:[%s91] sm:$0xff]
    %s93 = scalar_lea.vmem %s0, 64
    %v94 = vld [vmem:[%s93] sm:$0xff]
    %v95 = vld [vmem:[%s1] sm:$0xff]
    %97 = vset.pattern.permute.xlu0 0
    %98 = vperm.xlu0 %97, %v95
    %v99 = vpop.permute.xlu0 %98
    %v101 = vadd.f32 %v15, %v99
    %v102 = vadd.f32 %v16, %v99
    %104 = vset.pattern.permute.xlu0 0
    %105 = vperm.xlu0 %104, %v84
    %v106 = vpop.permute.xlu0 %105
    %v108 = vmul.f32 %v106, %v63
    %v109 = vmul.f32 %v106, %v64
    %111 = vset.pattern.permute.xlu0 0
    %112 = vperm.xlu0 %111, %v86
    %v113 = vpop.permute.xlu0 %112
    %v115 = vmul.f32 %v113, %v15
    %v116 = vmul.f32 %v113, %v16
    %v117 = vadd.f32 %v108, %v115
    %v118 = vadd.f32 %v109, %v116
    %120 = vset.pattern.permute.xlu0 0
    %121 = vperm.xlu0 %120, %v88
    %v122 = vpop.permute.xlu0 %121
    %v124 = vmul.f32 %v122, %v76
    %v125 = vmul.f32 %v122, %v77
    %v126 = vadd.f32 %v117, %v124
    %v127 = vadd.f32 %v118, %v125
    %v128 = vadd.f32 %v101, %v126
    %v129 = vadd.f32 %v102, %v127
    %131 = vset.pattern.permute.xlu0 0
    %132 = vperm.xlu0 %131, %v78
    %v133 = vpop.permute.xlu0 %132
    %v135 = vmul.f32 %v133, %v63
    %v136 = vmul.f32 %v133, %v64
    %138 = vset.pattern.permute.xlu0 0
    %139 = vperm.xlu0 %138, %v80
    %v140 = vpop.permute.xlu0 %139
    %v142 = vmul.f32 %v140, %v15
    %v143 = vmul.f32 %v140, %v16
    %v144 = vadd.f32 %v135, %v142
    %v145 = vadd.f32 %v136, %v143
    %147 = vset.pattern.permute.xlu0 0
    %148 = vperm.xlu0 %147, %v82
    %v149 = vpop.permute.xlu0 %148
    %v151 = vmul.f32 %v149, %v76
    %v152 = vmul.f32 %v149, %v77
    %v153 = vadd.f32 %v144, %v151
    %v154 = vadd.f32 %v145, %v152
    %155 = vrot.lane.b32.xlu0 %v153, 16
    %v156 = vpop.permute.xlu0 %155
    %157 = vrot.lane.b32.xlu0 %v154, 16
    %v158 = vpop.permute.xlu0 %157
    %vm159 = vcmp.lt.s32.totalorder %v18, 16
    %v160 = vsel %vm159, %v156, %v158
    %v161 = vsel %vm159, %v158, %v156
    %v162 = vsel %vm48, 1, 0
    %v163 = vsel %vm49, 1, 0
    %vm164 = vcmp.eq.s32.totalorder %v162, 1
    %vm165 = vcmp.eq.s32.totalorder %v163, 1
    %v166 = vsel %vm164, %v161, 0.0
    %v167 = vsel %vm165, %v160, 0.0
    %v168 = vadd.f32 %v128, %v166
    %v169 = vadd.f32 %v129, %v167
    %171 = vset.pattern.permute.xlu0 0
    %172 = vperm.xlu0 %171, %v90
    %v173 = vpop.permute.xlu0 %172
    %v175 = vmul.f32 %v173, %v63
    %v176 = vmul.f32 %v173, %v64
    %178 = vset.pattern.permute.xlu0 0
    %179 = vperm.xlu0 %178, %v92
    %v180 = vpop.permute.xlu0 %179
    %v182 = vmul.f32 %v180, %v15
    %v183 = vmul.f32 %v180, %v16
    %v184 = vadd.f32 %v175, %v182
    %v185 = vadd.f32 %v176, %v183
    %187 = vset.pattern.permute.xlu0 0
    %188 = vperm.xlu0 %187, %v94
    %v189 = vpop.permute.xlu0 %188
    %v191 = vmul.f32 %v189, %v76
    %v192 = vmul.f32 %v189, %v77
    %v193 = vadd.f32 %v184, %v191
    %v194 = vadd.f32 %v185, %v192
    %195 = vrot.lane.b32.xlu0 %v193, 112
    %v196 = vpop.permute.xlu0 %195
    %197 = vrot.lane.b32.xlu0 %v194, 112
    %v198 = vpop.permute.xlu0 %197
    %vm199 = vcmp.lt.s32.totalorder %v18, 112
    %v200 = vsel %vm199, %v196, %v198
    %v201 = vsel %vm199, %v198, %v196
    %v202 = vsel %vm50, 1, 0
    %v203 = vsel %vm51, 1, 0
    %vm204 = vcmp.eq.s32.totalorder %v202, 1
    %vm205 = vcmp.eq.s32.totalorder %v203, 1
    %v206 = vsel %vm204, %v200, 0.0
    %v207 = vsel %vm205, %v201, 0.0
    %v208 = vadd.f32 %v168, %v206
    %v209 = vadd.f32 %v169, %v207
    %210 = vst [vmem:[#allocation2] sm:$0xff] %v208
    %211 = vst [vmem:[#allocation2 + $0x8] sm:$0xff] %v209
    // Predicated region
    $region14: #{tpu_custom_call.1} parent=1 // pred_check
      _
    $region15: #{tpu_custom_call.1} parent=1 // pred_check_branch
      %213 = sbr.rel (0) target = $region17
    $region16: #{tpu_custom_call.1} parent=1 // pred_region
      %s215 = ssub.s32 256, 256
      %216 = vsyncadd [#allocation3], %s215
      %s218 = sshll.u32 [#allocation2], 4
      %s219 = int_to_ptr.vmem [resolvable:$true] %s218
      %221 = dma.vmem_to_hbm [thread:$0]  %s219, 256, %s3, [#allocation3]
    $region17: #{tpu_custom_call.1} parent=1 // pred_fallthru
      _
    // Predicated region
    $region18: #{tpu_custom_call.1} parent=1 // pred_check
      _
    $region19: #{tpu_custom_call.1} parent=1 // pred_check_branch
      %223 = sbr.rel (0) target = $region21
    $region20: #{tpu_custom_call.1} parent=1 // pred_region
      %224 = dma.done [#allocation3], 256
    $region21: #{tpu_custom_call.1} parent=1 // pred_fallthru
      _
    %225 = vsyncpa [#allocation3], 1

</llo_original>
